<compile_context>
chip_gen: v6e
topology: v6e:2x2x1
jax: 0.10.0
libtpu: 0.0.40
codegen_flags: <defaults>
</compile_context>

<pallas_src>
import functools
import math

import jax
import jax.numpy as jnp
from jax import lax
from jax.experimental import pallas as pl
from jax.experimental.pallas import tpu as pltpu


def _round_up(x: int, m: int) -> int:
    return (x + m - 1) // m * m


def prepare_table(table, *, lane_multiple=128, row_multiple=8):
    """Pad the (V, D) embedding table once at init time (lane-dense rows).

    Doing this per forward call would copy the whole table in HBM every step;
    call this once and pass the padded table (with out_dim=true embed_dim).
    """
    V, D = table.shape
    Vp, Dp = _round_up(V, row_multiple), _round_up(D, lane_multiple)
    if Vp == V and Dp == D:
        return table
    return jnp.pad(table, ((0, Vp - V), (0, Dp - D)))


# ---------------------------------------------------------------------------
# Strategy 1: tiled one-hot matmul (register-friendly chunked bag build).
# ---------------------------------------------------------------------------
def _onehot_matmul_kernel(idx_ref, w_ref, table_ref, out_ref, acc_ref, *,
                          v_tile, v_chunks, inv_scale):
    # grid = (B tiles ["parallel"], V tiles ["arbitrary" reduction, last]).
    k = pl.program_id(1)

    @pl.when(k == 0)
    def _():
        acc_ref[...] = jnp.zeros_like(acc_ref)

    idx = idx_ref[...]                          # (Bt, L) int32, lane-dense
    w = w_ref[...]                              # (Bt, L) f32
    bt, bag_len = idx.shape
    v_base = k * v_tile

    # Build the weighted one-hot in small V sub-chunks so the live bag stays
    # well inside the 64-vreg register file (no spill traffic), with the tile
    # base folded into the cheap (Bt, L) index array instead of the big iota.
    off = 0
    for chunk in v_chunks:
        iota_c = lax.broadcasted_iota(jnp.int32, (bt, chunk), 1)   # static lane iota
        local = idx - (v_base + off)                               # (Bt, L) ints, cheap
        bag = jnp.zeros((bt, chunk), jnp.float32)
        for l in range(bag_len):
            bag = bag + jnp.where(local[:, l:l + 1] == iota_c,
                                  w[:, l:l + 1], 0.0)
        # One MXU matmul per chunk, f32 accumulate.  A bf16 table runs as a
        # bf16 MXU pass (note: per-sample weights are then carried in bf16).
        acc_ref[...] += jnp.dot(bag.astype(table_ref.dtype),
                                table_ref[pl.ds(off, chunk), :],
                                preferred_element_type=jnp.float32)
        off += chunk

    @pl.when(k == pl.num_programs(1) - 1)
    def _():
        out_ref[...] = (acc_ref[...] * inv_scale).astype(out_ref.dtype)


def _xt2_onehot_matmul(idx, w, table, inv_scale, *, b_tile=256, v_tile=512,
                       v_chunk=128, vmem_limit_bytes=32 * 1024 * 1024,
                       resident_table_bytes=8 * 1024 * 1024):
    # TODO(synk): out-of-range indices are silently dropped here (no tile
    # matches); PyTorch raises instead.
    B, L = idx.shape
    V, D = table.shape
    itemsize = jnp.dtype(table.dtype).itemsize

    D_pad = _round_up(D, 128)                  # lane-dense table / output
    # b_tile=256 fills the MXU M dim on v6e/v7x; v5e (4x128^2 MXU) prefers 128.
    b_tile = min(b_tile, _round_up(B, 8))
    B_pad = _round_up(B, b_tile)

    V8 = _round_up(V, 8)
    if V8 * D_pad * itemsize <= resident_table_bytes:
        v_tile = V8            # whole table resident: constant table index map,
                               # so the table is never re-DMA'd across B tiles.
    else:
        v_tile = min(v_tile, V8)
    V_pad = _round_up(V, v_tile)

    v_chunk = max(8, min(v_chunk, v_tile))
    n_full, rem = divmod(v_tile, v_chunk)
    v_chunks = tuple([v_chunk] * n_full + ([rem] if rem else []))

    # Pad only when needed (pre-pad once via prepare_table to avoid per-call copies).
    if (V_pad != V) or (D_pad != D):
        table = jnp.pad(table, ((0, V_pad - V), (0, D_pad - D)))
    if B_pad != B:
        idx = jnp.pad(idx, ((0, B_pad - B), (0, 0)))
        w = jnp.pad(w, ((0, B_pad - B), (0, 0)))    # padded rows get weight 0

    grid = (B_pad // b_tile, V_pad // v_tile)
    kernel = functools.partial(_onehot_matmul_kernel, v_tile=v_tile,
                               v_chunks=v_chunks, inv_scale=inv_scale)

    out = pl.pallas_call(
        kernel,
        out_shape=jax.ShapeDtypeStruct((B_pad, D_pad), jnp.float32),
        grid_spec=pltpu.PrefetchScalarGridSpec(
            num_scalar_prefetch=0,
            grid=grid,
            in_specs=[
                pl.BlockSpec((b_tile, L), lambda b, k: (b, 0)),        # indices
                pl.BlockSpec((b_tile, L), lambda b, k: (b, 0)),        # weights
                pl.BlockSpec((v_tile, D_pad), lambda b, k: (k, 0)),    # table tile
            ],
            out_specs=pl.BlockSpec((b_tile, D_pad), lambda b, k: (b, 0)),
            scratch_shapes=[pltpu.VMEM((b_tile, D_pad), jnp.float32)],
        ),
        compiler_params=pltpu.CompilerParams(
            # batch axis parallel (2 TCs on v7x), vocab axis is the reduction.
            dimension_semantics=("parallel", "arbitrary"),
            # safe default for v7x's 64 MiB physical VMEM; raise toward 64-96 MiB
            # on v5e/v6e for bigger streaming table tiles.
            vmem_limit_bytes=vmem_limit_bytes,
        ),
    )(idx, w, table)
    return out


# ---------------------------------------------------------------------------
# Strategy 2: multi-row gather with in-flight row DMAs (large vocabularies).
# ---------------------------------------------------------------------------
def _row_gather_kernel(ids_ref, w_ref, table_ref, out_ref, rowbuf, sem,
                       acc_ref, *, bag_len, bags, inv_scale):
    # grid = (B // bags,).  Each step owns `bags` (=8) bags: per bag-position l
    # it gathers 8 embedding rows from HBM into a double-buffered (2, 8, D)
    # VMEM slab and accumulates w * row on full (8, D) vregs.
    blk = pl.program_id(0)
    base = blk * (bags * bag_len)

    def fetch(l, slot):
        for g in range(bags):
            row = ids_ref[base + g * bag_len + l]            # SMEM scalar read
            pltpu.make_async_copy(
                table_ref.at[pl.ds(row, 1), :],
                rowbuf.at[slot, pl.ds(g, 1), :],
                sem.at[slot, g],
            ).start()

    fetch(0, 0)                                              # prime slot 0
    acc_ref[...] = jnp.zeros_like(acc_ref)

    @pl.loop(0, bag_len)
    def _(l):
        slot = l & 1
        for g in range(bags):                                # wait current slot
            pltpu.make_async_copy(
                table_ref.at[pl.ds(0, 1), :],
                rowbuf.at[slot, pl.ds(g, 1), :],
                sem.at[slot, g],
            ).wait()

        @pl.when(l + 1 < bag_len)                            # prefetch next slot
        def _():
            fetch(l + 1, 1 - slot)

        # Extract this position's per-bag weights as an (bags, 1) column.
        w_blk = w_ref[...]                                   # (bags, L) f32
        lane = lax.broadcasted_iota(jnp.int32, w_blk.shape, 1)
        w_col = jnp.sum(jnp.where(lane == l, w_blk, 0.0), axis=1, keepdims=True)

        acc_ref[...] += rowbuf[slot].astype(jnp.float32) * w_col

    out_ref[...] = (acc_ref[...] * inv_scale).astype(out_ref.dtype)


def _xt2_row_gather(idx, w, table, inv_scale, *, bags_per_block=8,
                    vmem_limit_bytes=32 * 1024 * 1024):
    B, L = idx.shape
    V, D = table.shape
    D_pad = _round_up(D, 128)                                # lane-dense rows / output

    if D_pad != D:
        table = jnp.pad(table, ((0, 0), (0, D_pad - D)))     # hoist via prepare_table

    bags = bags_per_block
    B_pad = _round_up(B, bags)
    if B_pad != B:
        idx = jnp.pad(idx, ((0, B_pad - B), (0, 0)))
        w = jnp.pad(w, ((0, B_pad - B), (0, 0)))

    # TODO(synk): PyTorch raises on out-of-range indices; we clamp so a bad
    # index can never drive the row DMA out of bounds.
    ids_flat = jnp.clip(idx.astype(jnp.int32), 0, V - 1).reshape(B_pad * L)
    w = w.astype(jnp.float32)

    kernel = functools.partial(_row_gather_kernel, bag_len=L, bags=bags,
                               inv_scale=inv_scale)

    out = pl.pallas_call(
        kernel,
        out_shape=jax.ShapeDtypeStruct((B_pad, D_pad), jnp.float32),
        grid_spec=pltpu.PrefetchScalarGridSpec(
            num_scalar_prefetch=1,                           # lookup ids -> SMEM
            grid=(B_pad // bags,),
            in_specs=[
                pl.BlockSpec((bags, L), lambda b, ids: (b, 0)),   # per-sample weights
                pl.BlockSpec(memory_space=pl.ANY),                # table stays in HBM
            ],
            out_specs=pl.BlockSpec((bags, D_pad), lambda b, ids: (b, 0)),
            scratch_shapes=[
                pltpu.VMEM((2, bags, D_pad), table.dtype),        # double-buffered rows
                pltpu.SemaphoreType.DMA((2, bags)),               # per-row DMA sems
                pltpu.VMEM((bags, D_pad), jnp.float32),           # f32 accumulator
            ],
        ),
        compiler_params=pltpu.CompilerParams(
            dimension_semantics=("arbitrary",),
            vmem_limit_bytes=vmem_limit_bytes,
        ),
    )(ids_flat, w, table)
    return out


# ---------------------------------------------------------------------------
# Public wrapper (matches XT2EmbeddingBag.forward)
# ---------------------------------------------------------------------------
def xt2_embedding_bag(lookup_tensor, table, per_sample_weights=None,
                      mode="mean", *, strategy="auto", out_dim=None,
                      b_tile=256, v_tile=512, v_chunk=128,
                      bags_per_block=8, gather_threshold=8192):
    """Pallas implementation of XT2EmbeddingBag.forward.

    lookup_tensor: (B, L) integer indices into `table`
    table:         (V, D) embedding table (may be pre-padded via prepare_table)
    per_sample_weights: optional (B, L) float32
    mode: "sum" | "mean"  ("mean" divides by L, exactly like torch .mean(dim=1))
    out_dim: true embedding dim if `table` was pre-padded along D.
    """
    if mode not in ("sum", "mean"):
        raise ValueError(f"Not supported mode type {mode}")
    B, L = lookup_tensor.shape
    V, D = table.shape
    out_dim = D if out_dim is None else out_dim

    if per_sample_weights is None:
        per_sample_weights = jnp.ones((B, L), jnp.float32)

    idx = lookup_tensor.astype(jnp.int32)
    w = per_sample_weights.astype(jnp.float32)
    inv_scale = (1.0 / L) if mode == "mean" else 1.0

    if strategy == "auto":
        # NOTE: crossover is hardware dependent (gather is cheaper on v7x's HBM).
        strategy = "gather" if V > gather_threshold else "onehot"
    if strategy == "onehot":
        out = _xt2_onehot_matmul(idx, w, table, inv_scale, b_tile=b_tile,
                                 v_tile=v_tile, v_chunk=v_chunk)
    elif strategy == "gather":
        out = _xt2_row_gather(idx, w, table, inv_scale,
                              bags_per_block=bags_per_block)
    else:
        raise ValueError(f"unknown strategy {strategy}")
    return out[:B, :out_dim]


def make_embedding_table(key, dict_size, embed_dim, padding_idx=0):
    """Deterministic xavier_uniform init of (dict_size + 1, embed_dim), padding row zeroed."""
    V = dict_size + 1
    bound = math.sqrt(6.0 / (V + embed_dim))
    table = jax.random.uniform(key, (V, embed_dim), jnp.float32, -bound, bound)
    table = table.at[padding_idx].set(0.0)
    return table


def reference_embedding_bag(lookup_tensor, table, per_sample_weights=None, mode="mean"):
    out = jnp.take(table, lookup_tensor, axis=0)                 # (B, L, D)
    if per_sample_weights is not None:
        out = out * per_sample_weights[..., None]
    if mode == "sum":
        return out.sum(axis=1)
    return out.mean(axis=1)


if __name__ == "__main__":
    key = jax.random.PRNGKey(0)
    k_table, k_idx, k_w = jax.random.split(key, 3)

    dict_size, embed_dim = 32, 32
    batch, bag_len = 8, 8
    padding_idx = 0

    table = make_embedding_table(k_table, dict_size, embed_dim, padding_idx)
    # Hoist the lane/row padding out of the forward path (done once at init).
    table_padded = prepare_table(table)

    lookup = jax.random.randint(k_idx, (batch, bag_len), 0, dict_size + 1, jnp.int32)
    psw = jax.random.uniform(k_w, (batch, bag_len), jnp.float32)

    ref_mean = reference_embedding_bag(lookup, table, psw, mode="mean")
    ref_sum = reference_embedding_bag(lookup, table, None, mode="sum")

    for strategy in ("onehot", "gather"):
        out_mean = xt2_embedding_bag(lookup, table_padded, psw, mode="mean",
                                     strategy=strategy, out_dim=embed_dim)
        jax.block_until_ready(out_mean)
        out_sum = xt2_embedding_bag(lookup, table_padded, None, mode="sum",
                                    strategy=strategy, out_dim=embed_dim)
        jax.block_until_ready(out_sum)

        assert out_mean.shape == (batch, embed_dim), strategy
        assert out_sum.shape == (batch, embed_dim), strategy
        assert jnp.allclose(out_mean, ref_mean, atol=1e-5, rtol=1e-5), strategy
        assert jnp.allclose(out_sum, ref_sum, atol=1e-5, rtol=1e-5), strategy

    print("KERNEL_OK")
</pallas_src>

<mosaic_0001>
module attributes {stable_mosaic.version = 11 : i64} {
  func.func @_onehot_matmul_kernel(%arg0: i32, %arg1: i32, %arg2: memref<8x8xi32, #tpu.memory_space<vmem>>, %arg3: memref<8x8xf32, #tpu.memory_space<vmem>>, %arg4: memref<40x128xf32, #tpu.memory_space<vmem>>, %arg5: memref<8x128xf32, #tpu.memory_space<vmem>>, %arg6: memref<8x128xf32, #tpu.memory_space<vmem>>) attributes {dimension_semantics = [#tpu.dimension_semantics<parallel>, #tpu.dimension_semantics<arbitrary>], iteration_bounds = array<i64: 1, 1>, scalar_prefetch = 0 : i64, scratch_operands = 1 : i64, tpu.core_type = #tpu.core_type<tc>, window_params = [{transform_indices = @transform_0, window_bounds = array<i64: 8, 8>}, {transform_indices = @transform_1, window_bounds = array<i64: 8, 8>}, {transform_indices = @transform_2, window_bounds = array<i64: 40, 128>}, {transform_indices = @transform_3, window_bounds = array<i64: 8, 128>}]} {
    %c0_i32 = arith.constant 0 : i32
    %0 = arith.cmpi eq, %arg1, %c0_i32 : i32
    %1 = arith.extui %0 : i1 to i32
    %c0_i32_0 = arith.constant 0 : i32
    %2 = arith.cmpi ne, %1, %c0_i32_0 : i32
    scf.if %2 {
      %cst_22 = arith.constant 0.000000e+00 : f32
      %91 = vector.broadcast %cst_22 : f32 to vector<8x128xf32>
      %c0_23 = arith.constant 0 : index
      %c0_24 = arith.constant 0 : index
      %92 = vector.load %arg6[%c0_23, %c0_24] : memref<8x128xf32, #tpu.memory_space<vmem>>, vector<8x128xf32>
      tpu.vector_store %arg6[%c0_23, %c0_24], %91 {strides = array<i32>} : memref<8x128xf32, #tpu.memory_space<vmem>>, vector<8x128xf32>,
    } else {
    }
    %c0 = arith.constant 0 : index
    %c0_1 = arith.constant 0 : index
    %3 = vector.load %arg2[%c0, %c0_1] : memref<8x8xi32, #tpu.memory_space<vmem>>, vector<8x8xi32>
    %c0_2 = arith.constant 0 : index
    %c0_3 = arith.constant 0 : index
    %4 = vector.load %arg3[%c0_2, %c0_3] : memref<8x8xf32, #tpu.memory_space<vmem>>, vector<8x8xf32>
    %c40_i32 = arith.constant 40 : i32
    %5 = arith.muli %arg1, %c40_i32 : i32
    %6 = tpu.iota {dimensions = array<i32: 1>} : vector<8x40xi32>
    %c0_i32_4 = arith.constant 0 : i32
    %7 = arith.addi %5, %c0_i32_4 : i32
    %8 = vector.broadcast %7 : i32 to vector<8x8xi32>
    %9 = arith.subi %3, %8 : vector<8x8xi32>
    %cst = arith.constant 0.000000e+00 : f32
    %10 = vector.broadcast %cst : f32 to vector<8x40xf32>
    %11 = vector.extract_strided_slice %9 {offsets = [0, 0], sizes = [8, 1], strides = [1, 1]} : vector<8x8xi32> to vector<8x1xi32>
    %12 = vector.broadcast %11 : vector<8x1xi32> to vector<8x40xi32>
    %13 = arith.cmpi eq, %12, %6 : vector<8x40xi32>
    %14 = vector.extract_strided_slice %4 {offsets = [0, 0], sizes = [8, 1], strides = [1, 1]} : vector<8x8xf32> to vector<8x1xf32>
    %cst_5 = arith.constant 0.000000e+00 : f32
    %15 = vector.shape_cast %14 : vector<8x1xf32> to vector<8x1xf32>
    %16 = vector.broadcast %15 : vector<8x1xf32> to vector<8x40xf32>
    %17 = vector.broadcast %cst_5 : f32 to vector<8x40xf32>
    %18 = arith.select %13, %16, %17 : vector<8x40xi1>, vector<8x40xf32>
    %19 = arith.addf %10, %18 : vector<8x40xf32>
    %20 = vector.extract_strided_slice %9 {offsets = [0, 1], sizes = [8, 1], strides = [1, 1]} : vector<8x8xi32> to vector<8x1xi32>
    %21 = vector.broadcast %20 : vector<8x1xi32> to vector<8x40xi32>
    %22 = arith.cmpi eq, %21, %6 : vector<8x40xi32>
    %23 = vector.extract_strided_slice %4 {offsets = [0, 1], sizes = [8, 1], strides = [1, 1]} : vector<8x8xf32> to vector<8x1xf32>
    %cst_6 = arith.constant 0.000000e+00 : f32
    %24 = vector.shape_cast %23 : vector<8x1xf32> to vector<8x1xf32>
    %25 = vector.broadcast %24 : vector<8x1xf32> to vector<8x40xf32>
    %26 = vector.broadcast %cst_6 : f32 to vector<8x40xf32>
    %27 = arith.select %22, %25, %26 : vector<8x40xi1>, vector<8x40xf32>
    %28 = arith.addf %19, %27 : vector<8x40xf32>
    %29 = vector.extract_strided_slice %9 {offsets = [0, 2], sizes = [8, 1], strides = [1, 1]} : vector<8x8xi32> to vector<8x1xi32>
    %30 = vector.broadcast %29 : vector<8x1xi32> to vector<8x40xi32>
    %31 = arith.cmpi eq, %30, %6 : vector<8x40xi32>
    %32 = vector.extract_strided_slice %4 {offsets = [0, 2], sizes = [8, 1], strides = [1, 1]} : vector<8x8xf32> to vector<8x1xf32>
    %cst_7 = arith.constant 0.000000e+00 : f32
    %33 = vector.shape_cast %32 : vector<8x1xf32> to vector<8x1xf32>
    %34 = vector.broadcast %33 : vector<8x1xf32> to vector<8x40xf32>
    %35 = vector.broadcast %cst_7 : f32 to vector<8x40xf32>
    %36 = arith.select %31, %34, %35 : vector<8x40xi1>, vector<8x40xf32>
    %37 = arith.addf %28, %36 : vector<8x40xf32>
    %38 = vector.extract_strided_slice %9 {offsets = [0, 3], sizes = [8, 1], strides = [1, 1]} : vector<8x8xi32> to vector<8x1xi32>
    %39 = vector.broadcast %38 : vector<8x1xi32> to vector<8x40xi32>
    %40 = arith.cmpi eq, %39, %6 : vector<8x40xi32>
    %41 = vector.extract_strided_slice %4 {offsets = [0, 3], sizes = [8, 1], strides = [1, 1]} : vector<8x8xf32> to vector<8x1xf32>
    %cst_8 = arith.constant 0.000000e+00 : f32
    %42 = vector.shape_cast %41 : vector<8x1xf32> to vector<8x1xf32>
    %43 = vector.broadcast %42 : vector<8x1xf32> to vector<8x40xf32>
    %44 = vector.broadcast %cst_8 : f32 to vector<8x40xf32>
    %45 = arith.select %40, %43, %44 : vector<8x40xi1>, vector<8x40xf32>
    %46 = arith.addf %37, %45 : vector<8x40xf32>
    %47 = vector.extract_strided_slice %9 {offsets = [0, 4], sizes = [8, 1], strides = [1, 1]} : vector<8x8xi32> to vector<8x1xi32>
    %48 = vector.broadcast %47 : vector<8x1xi32> to vector<8x40xi32>
    %49 = arith.cmpi eq, %48, %6 : vector<8x40xi32>
    %50 = vector.extract_strided_slice %4 {offsets = [0, 4], sizes = [8, 1], strides = [1, 1]} : vector<8x8xf32> to vector<8x1xf32>
    %cst_9 = arith.constant 0.000000e+00 : f32
    %51 = vector.shape_cast %50 : vector<8x1xf32> to vector<8x1xf32>
    %52 = vector.broadcast %51 : vector<8x1xf32> to vector<8x40xf32>
    %53 = vector.broadcast %cst_9 : f32 to vector<8x40xf32>
    %54 = arith.select %49, %52, %53 : vector<8x40xi1>, vector<8x40xf32>
    %55 = arith.addf %46, %54 : vector<8x40xf32>
    %56 = vector.extract_strided_slice %9 {offsets = [0, 5], sizes = [8, 1], strides = [1, 1]} : vector<8x8xi32> to vector<8x1xi32>
    %57 = vector.broadcast %56 : vector<8x1xi32> to vector<8x40xi32>
    %58 = arith.cmpi eq, %57, %6 : vector<8x40xi32>
    %59 = vector.extract_strided_slice %4 {offsets = [0, 5], sizes = [8, 1], strides = [1, 1]} : vector<8x8xf32> to vector<8x1xf32>
    %cst_10 = arith.constant 0.000000e+00 : f32
    %60 = vector.shape_cast %59 : vector<8x1xf32> to vector<8x1xf32>
    %61 = vector.broadcast %60 : vector<8x1xf32> to vector<8x40xf32>
    %62 = vector.broadcast %cst_10 : f32 to vector<8x40xf32>
    %63 = arith.select %58, %61, %62 : vector<8x40xi1>, vector<8x40xf32>
    %64 = arith.addf %55, %63 : vector<8x40xf32>
    %65 = vector.extract_strided_slice %9 {offsets = [0, 6], sizes = [8, 1], strides = [1, 1]} : vector<8x8xi32> to vector<8x1xi32>
    %66 = vector.broadcast %65 : vector<8x1xi32> to vector<8x40xi32>
    %67 = arith.cmpi eq, %66, %6 : vector<8x40xi32>
    %68 = vector.extract_strided_slice %4 {offsets = [0, 6], sizes = [8, 1], strides = [1, 1]} : vector<8x8xf32> to vector<8x1xf32>
    %cst_11 = arith.constant 0.000000e+00 : f32
    %69 = vector.shape_cast %68 : vector<8x1xf32> to vector<8x1xf32>
    %70 = vector.broadcast %69 : vector<8x1xf32> to vector<8x40xf32>
    %71 = vector.broadcast %cst_11 : f32 to vector<8x40xf32>
    %72 = arith.select %67, %70, %71 : vector<8x40xi1>, vector<8x40xf32>
    %73 = arith.addf %64, %72 : vector<8x40xf32>
    %74 = vector.extract_strided_slice %9 {offsets = [0, 7], sizes = [8, 1], strides = [1, 1]} : vector<8x8xi32> to vector<8x1xi32>
    %75 = vector.broadcast %74 : vector<8x1xi32> to vector<8x40xi32>
    %76 = arith.cmpi eq, %75, %6 : vector<8x40xi32>
    %77 = vector.extract_strided_slice %4 {offsets = [0, 7], sizes = [8, 1], strides = [1, 1]} : vector<8x8xf32> to vector<8x1xf32>
    %cst_12 = arith.constant 0.000000e+00 : f32
    %78 = vector.shape_cast %77 : vector<8x1xf32> to vector<8x1xf32>
    %79 = vector.broadcast %78 : vector<8x1xf32> to vector<8x40xf32>
    %80 = vector.broadcast %cst_12 : f32 to vector<8x40xf32>
    %81 = arith.select %76, %79, %80 : vector<8x40xi1>, vector<8x40xf32>
    %82 = arith.addf %73, %81 : vector<8x40xf32>
    %c0_13 = arith.constant 0 : index
    %c0_14 = arith.constant 0 : index
    %83 = vector.load %arg6[%c0_13, %c0_14] : memref<8x128xf32, #tpu.memory_space<vmem>>, vector<8x128xf32>
    %c0_15 = arith.constant 0 : index
    %c0_16 = arith.constant 0 : index
    %84 = vector.load %arg4[%c0_15, %c0_16] : memref<40x128xf32, #tpu.memory_space<vmem>>, vector<40x128xf32>
    %cst_17 = arith.constant dense<0.000000e+00> : vector<8x128xf32>
    %85 = tpu.matmul %82, %84, %cst_17 {dimension_numbers = #tpu.dot_dimension_numbers<[1], [0], [0], [1], [0, 0, 1, 1], [], []>} : vector<8x40xf32>, vector<40x128xf32>, vector<8x128xf32> -> vector<8x128xf32>
    %86 = arith.addf %83, %85 : vector<8x128xf32>
    %c0_18 = arith.constant 0 : index
    %c0_19 = arith.constant 0 : index
    %87 = vector.load %arg6[%c0_18, %c0_19] : memref<8x128xf32, #tpu.memory_space<vmem>>, vector<8x128xf32>
    tpu.vector_store %arg6[%c0_18, %c0_19], %86 {strides = array<i32>} : memref<8x128xf32, #tpu.memory_space<vmem>>, vector<8x128xf32>,
    %c0_i32_20 = arith.constant 0 : i32
    %88 = arith.cmpi eq, %arg1, %c0_i32_20 : i32
    %89 = arith.extui %88 : i1 to i32
    %c0_i32_21 = arith.constant 0 : i32
    %90 = arith.cmpi ne, %89, %c0_i32_21 : i32
    scf.if %90 {
      %c0_22 = arith.constant 0 : index
      %c0_23 = arith.constant 0 : index
      %91 = vector.load %arg6[%c0_22, %c0_23] : memref<8x128xf32, #tpu.memory_space<vmem>>, vector<8x128xf32>
      %cst_24 = arith.constant 1.250000e-01 : f32
      %92 = vector.broadcast %cst_24 : f32 to vector<8x128xf32>
      %93 = arith.mulf %91, %92 : vector<8x128xf32>
      %c0_25 = arith.constant 0 : index
      %c0_26 = arith.constant 0 : index
      %94 = vector.load %arg5[%c0_25, %c0_26] : memref<8x128xf32, #tpu.memory_space<vmem>>, vector<8x128xf32>
      tpu.vector_store %arg5[%c0_25, %c0_26], %93 {strides = array<i32>} : memref<8x128xf32, #tpu.memory_space<vmem>>, vector<8x128xf32>,
    } else {
    }
    return
  }
  func.func @transform_0(%arg0: i32, %arg1: i32) -> (i32, i32) {
    %c0_i32 = arith.constant 0 : i32
    %c0_i32_0 = arith.constant 0 : i32
    return %arg0, %c0_i32 : i32, i32
  }
  func.func @transform_1(%arg0: i32, %arg1: i32) -> (i32, i32) {
    %c0_i32 = arith.constant 0 : i32
    %c0_i32_0 = arith.constant 0 : i32
    return %arg0, %c0_i32 : i32, i32
  }
  func.func @transform_2(%arg0: i32, %arg1: i32) -> (i32, i32) {
    %c0_i32 = arith.constant 0 : i32
    %c0_i32_0 = arith.constant 0 : i32
    return %arg1, %c0_i32 : i32, i32
  }
  func.func @transform_3(%arg0: i32, %arg1: i32) -> (i32, i32) {
    %c0_i32 = arith.constant 0 : i32
    %c0_i32_0 = arith.constant 0 : i32
    return %arg0, %c0_i32 : i32, i32
  }
}

</mosaic_0001>

<llo_original>
// kernel: tpu_custom_call.1
$region0: #{tpu_custom_call.1}
  #allocation0 [shape = 'u32[]', space=smem, size = 0x4, offset = 0x4, fixed_abs, tag = 'smem constant byte address 0x4 - core index']
  #allocation1 [shape = 'u32[144,128]{1,0:T(1,128)}', space=vmem, size = 0x12000, scoped, tag = 'internal scratch']
  #allocation2 [shape = 'f32[8,128]{1,0:T(8,128)}', space=vmem, size = 0x1000, scoped, tag = 'scratch operand']
  %s0 = inlined_call_operand.hbm [shape: s32[8,8], index: 0, kind: input, shape index: {}]
  %s1 = inlined_call_operand.hbm [shape: f32[8,8], index: 1, kind: input, shape index: {}]
  %s2 = inlined_call_operand.hbm [shape: f32[40,128], index: 2, kind: input, shape index: {}]
  %s3 = inlined_call_operand.hbm [shape: f32[8,128], index: 3, kind: output, shape index: {}]
  %s4 = sld [smem:[#allocation0]]
  $region42: #{tpu_custom_call.1} parent=0
    _
  %s6 = ssub.s32 1, %s4
  %s7 = scalar_select 0, %s6, %s4
  $region1: #{tpu_custom_call.1} parent=0
    #allocation3 [shape = 'u8[4096]{0}', space=vmem, size = 0x1000, scoped, tag = 'input window, operand 0, single buffered']
    #allocation4 [shape = 's32[1]{0}', space=sflag, size = 0x4, scoped, tag = 'scoped memory for tpu_custom_call.1']
    #allocation5 [shape = 's32[1]{0}', space=sflag, size = 0x4, scoped, tag = 'scoped memory for tpu_custom_call.1']
    #allocation6 [shape = 'u8[4096]{0}', space=vmem, size = 0x1000, scoped, tag = 'input window, operand 1, single buffered']
    #allocation7 [shape = 's32[1]{0}', space=sflag, size = 0x4, scoped, tag = 'scoped memory for tpu_custom_call.1']
    #allocation8 [shape = 'u8[20480]{0}', space=vmem, size = 0x5000, scoped, tag = 'input window, operand 2, single buffered']
    #allocation9 [shape = 'u8[4096]{0}', space=vmem, size = 0x1000, scoped, tag = 'output window, operand 0, single buffered']
    %8 = vsyncpa [#allocation4], 0
    %9 = vsyncpa [#allocation7], 0
    %10 = vsyncpa [#allocation5], 0
    // Predicated region
    $region2: #{tpu_custom_call.1} parent=1 // pred_check
      _
    $region3: #{tpu_custom_call.1} parent=1 // pred_check_branch
      %12 = sbr.rel (0) target = $region5
    $region4: #{tpu_custom_call.1} parent=1 // pred_region
      %s14 = ssub.s32 128, 128
      %15 = vsyncadd [#allocation4], %s14
      %s17 = sshll.u32 [#allocation3], 4
      %s18 = int_to_ptr.vmem [resolvable:$true] %s17
      %20 = dma.hbm_to_vmem [thread:$0]  %s0, 128, %s18, [#allocation4]
    $region5: #{tpu_custom_call.1} parent=1 // pred_fallthru
      _
    // Predicated region
    $region6: #{tpu_custom_call.1} parent=1 // pred_check
      _
    $region7: #{tpu_custom_call.1} parent=1 // pred_check_branch
      %22 = sbr.rel (0) target = $region9
    $region8: #{tpu_custom_call.1} parent=1 // pred_region
      %s24 = ssub.s32 128, 128
      %25 = vsyncadd [#allocation7], %s24
      %s27 = sshll.u32 [#allocation6], 4
      %s28 = int_to_ptr.vmem [resolvable:$true] %s27
      %30 = dma.hbm_to_vmem [thread:$0]  %s1, 128, %s28, [#allocation7]
    $region9: #{tpu_custom_call.1} parent=1 // pred_fallthru
      _
    // Predicated region
    $region10: #{tpu_custom_call.1} parent=1 // pred_check
      _
    $region11: #{tpu_custom_call.1} parent=1 // pred_check_branch
      %32 = sbr.rel (0) target = $region13
    $region12: #{tpu_custom_call.1} parent=1 // pred_region
      %s34 = ssub.s32 640, 640
      %35 = vsyncadd [#allocation7], %s34
      %s36 = sshll.u32 [#allocation8], 4
      %s37 = int_to_ptr.vmem [resolvable:$true] %s36
      %42 = dma.hbm_to_vmem [thread:$0]  %s2, 640, %s37, [#allocation7], 128, 128, 8
    $region13: #{tpu_custom_call.1} parent=1 // pred_fallthru
      _
    // Predicated region
    $region14: #{tpu_custom_call.1} parent=1 // pred_check
      _
    $region15: #{tpu_custom_call.1} parent=1 // pred_check_branch
      %44 = sbr.rel (0) target = $region17
    $region16: #{tpu_custom_call.1} parent=1 // pred_region
      %45 = dma.done [#allocation4], 128
    $region17: #{tpu_custom_call.1} parent=1 // pred_fallthru
      _
    // Predicated region
    $region18: #{tpu_custom_call.1} parent=1 // pred_check
      _
    $region19: #{tpu_custom_call.1} parent=1 // pred_check_branch
      %47 = sbr.rel (0) target = $region21
    $region20: #{tpu_custom_call.1} parent=1 // pred_region
      %48 = dma.done [#allocation7], 128
    $region21: #{tpu_custom_call.1} parent=1 // pred_fallthru
      _
    // Predicated region
    $region22: #{tpu_custom_call.1} parent=1 // pred_check
      _
    $region23: #{tpu_custom_call.1} parent=1 // pred_check_branch
      %50 = sbr.rel (0) target = $region25
    $region24: #{tpu_custom_call.1} parent=1 // pred_region
      %51 = dma.done [#allocation7], 640
    $region25: #{tpu_custom_call.1} parent=1 // pred_fallthru
      _
    %p52 = scmp.eq.s32.totalorder 0, 0
    // Predicated region
    $region26: #{tpu_custom_call.1} parent=1 // pred_check
      %p53 = pneg %p52
    $region27: #{tpu_custom_call.1} parent=1 // pred_check_branch
      %55 = sbr.rel (%p53) target = $region29
    $region28: #{tpu_custom_call.1} parent=1 // pred_region
      %56 = vst [vmem:[#allocation2] sm:$0xff] 0.0
    $region29: #{tpu_custom_call.1} parent=1 // pred_fallthru
      _
    %v57 = vld [vmem:[#allocation3] sm:$0xff]
    %v58 = vld [vmem:[#allocation6] sm:$0xff]
    %s59 = smul.u32 0, 40
    %v60 = vlaneseq
    %v61 = vand.u32 %v60, 127
    %v62 = vstv %s59
    %v63 = vsub.s32 %v57, %v62
    %64 = vset.pattern.permute.xlu0 0
    %65 = vperm.xlu0 %64, %v63
    %v66 = vpop.permute.xlu0 %65
    %vm67 = vcmp.eq.s32.totalorder %v66, %v61
    %69 = vset.pattern.permute.xlu0 0
    %70 = vperm.xlu0 %69, %v58
    %v71 = vpop.permute.xlu0 %70
    %v73 = vsel %vm67, %v71, 0.0
    %v74 = vadd.f32 %v73, 0.0
    %75 = vset.pattern.permute.xlu0 1
    %76 = vperm.xlu0 %75, %v63
    %v77 = vpop.permute.xlu0 %76
    %vm78 = vcmp.eq.s32.totalorder %v77, %v61
    %79 = vset.pattern.permute.xlu0 1
    %80 = vperm.xlu0 %79, %v58
    %v81 = vpop.permute.xlu0 %80
    %v83 = vsel %vm78, %v81, 0.0
    %v84 = vadd.f32 %v74, %v83
    %85 = vset.pattern.permute.xlu0 2
    %86 = vperm.xlu0 %85, %v63
    %v87 = vpop.permute.xlu0 %86
    %vm88 = vcmp.eq.s32.totalorder %v87, %v61
    %89 = vset.pattern.permute.xlu0 2
    %90 = vperm.xlu0 %89, %v58
    %v91 = vpop.permute.xlu0 %90
    %v93 = vsel %vm88, %v91, 0.0
    %v94 = vadd.f32 %v84, %v93
    %95 = vset.pattern.permute.xlu0 3
    %96 = vperm.xlu0 %95, %v63
    %v97 = vpop.permute.xlu0 %96
    %vm98 = vcmp.eq.s32.totalorder %v97, %v61
    %99 = vset.pattern.permute.xlu0 3
    %100 = vperm.xlu0 %99, %v58
    %v101 = vpop.permute.xlu0 %100
    %v103 = vsel %vm98, %v101, 0.0
    %v104 = vadd.f32 %v94, %v103
    %105 = vset.pattern.permute.xlu0 4
    %106 = vperm.xlu0 %105, %v63
    %v107 = vpop.permute.xlu0 %106
    %vm108 = vcmp.eq.s32.totalorder %v107, %v61
    %109 = vset.pattern.permute.xlu0 4
    %110 = vperm.xlu0 %109, %v58
    %v111 = vpop.permute.xlu0 %110
    %v113 = vsel %vm108, %v111, 0.0
    %v114 = vadd.f32 %v104, %v113
    %115 = vset.pattern.permute.xlu0 5
    %116 = vperm.xlu0 %115, %v63
    %v117 = vpop.permute.xlu0 %116
    %vm118 = vcmp.eq.s32.totalorder %v117, %v61
    %119 = vset.pattern.permute.xlu0 5
    %120 = vperm.xlu0 %119, %v58
    %v121 = vpop.permute.xlu0 %120
    %v123 = vsel %vm118, %v121, 0.0
    %v124 = vadd.f32 %v114, %v123
    %125 = vset.pattern.permute.xlu0 6
    %126 = vperm.xlu0 %125, %v63
    %v127 = vpop.permute.xlu0 %126
    %vm128 = vcmp.eq.s32.totalorder %v127, %v61
    %129 = vset.pattern.permute.xlu0 6
    %130 = vperm.xlu0 %129, %v58
    %v131 = vpop.permute.xlu0 %130
    %v133 = vsel %vm128, %v131, 0.0
    %v134 = vadd.f32 %v124, %v133
    %135 = vset.pattern.permute.xlu0 7
    %136 = vperm.xlu0 %135, %v63
    %v137 = vpop.permute.xlu0 %136
    %vm138 = vcmp.eq.s32.totalorder %v137, %v61
    %139 = vset.pattern.permute.xlu0 7
    %140 = vperm.xlu0 %139, %v58
    %v141 = vpop.permute.xlu0 %140
    %v143 = vsel %vm138, %v141, 0.0
    %v144 = vadd.f32 %v134, %v143
    %v145 = vld [vmem:[#allocation2] sm:$0xff]
    %v146 = vld [vmem:[#allocation8] sm:$0xff]
    %v147 = vld [vmem:[#allocation8 + $0x8] sm:$0xff]
    %v148 = vld [vmem:[#allocation8 + $0x10] sm:$0xff]
    %v149 = vld [vmem:[#allocation8 + $0x18] sm:$0xff]
    %v150 = vld [vmem:[#allocation8 + $0x20] sm:$0xff]
    %vm151 = vcmask 326656
    %v153 = vsel %vm151, %v144, 0
    %155 = vmatprep.subr.mxu0 0.0
    %156 = vmatpush1.msra.mxu0 0.0
    %157 = vmatprep.subr.mxu0 0.0
    %158 = vmatpush1.msra.mxu0 0.0
    %159 = vmatprep.subr.mxu0 0.0
    %160 = vmatpush1.msra.mxu0 0.0
    %161 = vmatprep.subr.mxu0 0.0
    %162 = vmatpush1.msra.mxu0 0.0
    %163 = vmatprep.subr.mxu0 0.0
    %164 = vmatpush1.msra.mxu0 0.0
    %165 = vmatprep.subr.mxu0 0.0
    %166 = vmatpush1.msra.mxu0 0.0
    %167 = vmatprep.subr.mxu0 0.0
    %168 = vmatpush1.msra.mxu0 0.0
    %169 = vmatprep.subr.mxu0 0.0
    %170 = vmatpush1.msra.mxu0 0.0
    %171 = vmatprep.subr.mxu0 0.0
    %172 = vmatpush1.msra.mxu0 0.0
    %173 = vmatprep.subr.mxu0 0.0
    %174 = vmatpush1.msra.mxu0 0.0
    %175 = vmatprep.subr.mxu0 0.0
    %176 = vmatpush1.msra.mxu0 0.0
    %177 = vmatprep.subr.mxu0 0.0
    %178 = vmatpush1.msra.mxu0 %v150
    %179 = vmatprep.subr.mxu0 0.0
    %180 = vmatpush1.msra.mxu0 %v149
    %181 = vmatprep.subr.mxu0 0.0
    %182 = vmatpush1.msra.mxu0 %v148
    %183 = vmatprep.subr.mxu0 0.0
    %184 = vmatpush1.msra.mxu0 %v147
    %185 = vmatprep.subr.mxu0 0.0
    %186 = vmatpush1.msra.mxu0 %v146
    %187 = vmatprep.subr.mxu0 0.0
    %188 = vmatpush2.msra.mxu0 0.0
    %189 = vmatprep.subr.mxu0 0.0
    %190 = vmatpush2.msra.mxu0 0.0
    %191 = vmatprep.subr.mxu0 0.0
    %192 = vmatpush2.msra.mxu0 0.0
    %193 = vmatprep.subr.mxu0 0.0
    %194 = vmatpush2.msra.mxu0 0.0
    %195 = vmatprep.subr.mxu0 0.0
    %196 = vmatpush2.msra.mxu0 0.0
    %197 = vmatprep.subr.mxu0 0.0
    %198 = vmatpush2.msra.mxu0 0.0
    %199 = vmatprep.subr.mxu0 0.0
    %200 = vmatpush2.msra.mxu0 0.0
    %201 = vmatprep.subr.mxu0 0.0
    %202 = vmatpush2.msra.mxu0 0.0
    %203 = vmatprep.subr.mxu0 0.0
    %204 = vmatpush2.msra.mxu0 0.0
    %205 = vmatprep.subr.mxu0 0.0
    %206 = vmatpush2.msra.mxu0 0.0
    %207 = vmatprep.subr.mxu0 0.0
    %208 = vmatpush2.msra.mxu0 0.0
    %209 = vmatprep.subr.mxu0 0.0
    %210 = vmatpush2.msra.mxu0 0.0
    %211 = vmatprep.subr.mxu0 0.0
    %212 = vmatpush2.msra.mxu0 0.0
    %213 = vmatprep.subr.mxu0 0.0
    %214 = vmatpush2.msra.mxu0 0.0
    %215 = vmatprep.subr.mxu0 0.0
    %216 = vmatpush2.msra.mxu0 0.0
    %217 = vmatprep.subr.mxu0 0.0
    %218 = vmatpush2.msra.mxu0 0.0
    %219 = vmatprep.mubr.f32.mxu0 0.0
    %220 = vmatmul.mubr.f32.gmra.mxu0 %v153
    %v221 = vpop.f32.mrf.mxu0
    %v222 = vadd.f32 0.0, %v221
    %v223 = vpop.f32.mrf.mxu0
    %224 = vdwg.mxu0
    %v225 = vadd.f32 %v145, %v222
    %226 = vst [vmem:[#allocation2] sm:$0xff] %v225
    // Predicated region
    $region30: #{tpu_custom_call.1} parent=1 // pred_check
      %p227 = pneg %p52
    $region31: #{tpu_custom_call.1} parent=1 // pred_check_branch
      %229 = sbr.rel (%p227) target = $region33
    $region32: #{tpu_custom_call.1} parent=1 // pred_region
      %v230 = vld [vmem:[#allocation2] sm:$0xff]
      %v231 = vmul.f32 %v230, 0.125
      %232 = vst [vmem:[#allocation9] sm:$0xff] %v231
    $region33: #{tpu_custom_call.1} parent=1 // pred_fallthru
      _
    // Predicated region
    $region34: #{tpu_custom_call.1} parent=1 // pred_check
      _
    $region35: #{tpu_custom_call.1} parent=1 // pred_check_branch
      %234 = sbr.rel (0) target = $region37
    $region36: #{tpu_custom_call.1} parent=1 // pred_region
      %s236 = ssub.s32 128, 128
      %237 = vsyncadd [#allocation5], %s236
      %s239 = sshll.u32 [#allocation9], 4
      %s240 = int_to_ptr.vmem [resolvable:$true] %s239
      %242 = dma.vmem_to_hbm [thread:$0]  %s240, 128, %s3, [#allocation5]
    $region37: #{tpu_custom_call.1} parent=1 // pred_fallthru
      _
    // Predicated region
    $region38: #{tpu_custom_call.1} parent=1 // pred_check
      _
    $region39: #{tpu_custom_call.1} parent=1 // pred_check_branch
      %244 = sbr.rel (0) target = $region41
    $region40: #{tpu_custom_call.1} parent=1 // pred_region
      %245 = dma.done [#allocation5], 128
    $region41: #{tpu_custom_call.1} parent=1 // pred_fallthru
      _
    %246 = vsyncpa [#allocation4], 1
    %247 = vsyncpa [#allocation7], 1
    %248 = vsyncpa [#allocation5], 1

</llo_original>
